<compile_context>
chip_gen: v7x
topology: tpu7x:2x2x1
jax: 0.10.0
libtpu: 0.0.40
codegen_flags: <defaults>
</compile_context>

<pallas_src>
import functools

import jax
import jax.numpy as jnp
from jax.experimental import pallas as pl
from jax.experimental.pallas import tpu as pltpu

_NEG_INF = -1e30  # finite, so 0 * _NEG_INF == 0 inside the one-hot matmul


def _round_up(x, m):
    return ((x + m - 1) // m) * m


def _device_tuning():
    """(preferred TILE_N rows, VMEM byte cap) for the local TPU generation.

    The kernel is writeback/overhead bound on every generation, so all chips
    get large tiles; only the VMEM cap differs (v7x has 64 MiB per TC).
    """
    kind = ""
    try:
        kind = jax.devices()[0].device_kind.lower()
    except Exception:
        pass
    if "v7" in kind:
        return 2048, 56 * 1024 * 1024
    # v5e / v6e: 128 MiB physical VMEM.
    return 2048, 100 * 1024 * 1024


def pad_embedding_table(table):
    """Pad the (V, V) table to (Vp, Vp), Vp 128-aligned.  Call ONCE at init.

    Padded columns are pre-filled with -1e30 so every gathered row already
    carries the column mask the cross-entropy needs; padded rows are never
    gathered (token ids are < V).
    """
    V = table.shape[0]
    Vp = _round_up(V, 128)
    table_p = jnp.full((Vp, Vp), _NEG_INF, dtype=jnp.float32)
    return table_p.at[:V, :V].set(table.astype(jnp.float32))


def _bigram_kernel(tok_ref, table_ref, *out_refs, n_valid, compute_loss,
                   write_logits):
    """One N-tile: one-hot MXU gather (+ optional logits write / partial NLL).

    tok_ref   : (TILE_N, C) int32 VMEM, C=2 (idx, tgt) or C=1 (idx only)
    table_ref : (Vp, Vp)    float32 VMEM (resident; padded cols already -1e30)
    out_refs  : [logits (TILE_N, Vp) VMEM]? + [loss (1,1) SMEM partial sum]?
    """
    tile_n = tok_ref.shape[0]
    Vp = table_ref.shape[1]

    idx = tok_ref[:, 0:1]                                        # (TILE_N, 1)
    cls = jax.lax.broadcasted_iota(jnp.int32, (tile_n, Vp), 1)   # class per lane

    # Embedding gather as a one-hot matmul on the MXU.  HIGHEST precision keeps
    # it exact in f32 (multi-pass); free because the kernel is memory-bound.
    one_hot = (cls == idx).astype(jnp.float32)                   # (TILE_N, Vp)
    logits = jnp.dot(one_hot, table_ref[...],
                     preferred_element_type=jnp.float32,
                     precision=jax.lax.Precision.HIGHEST)        # (TILE_N, Vp)

    oi = 0
    if write_logits:
        out_refs[oi][...] = logits
        oi += 1

    if compute_loss:
        tgt = tok_ref[:, 1:2]                                    # (TILE_N, 1)
        # Cross entropy: logsumexp(logits) - logits[target].  Padded columns
        # already hold -1e30 (baked into the table) -> no explicit column mask.
        m = jnp.max(logits, axis=-1, keepdims=True)
        lse = jnp.log(jnp.sum(jnp.exp(logits - m), axis=-1, keepdims=True)) + m
        picked = jnp.sum(jnp.where(cls == tgt, logits, 0.0),
                         axis=-1, keepdims=True)
        nll = lse - picked                                       # (TILE_N, 1)
        # Mask out padded token rows (global row >= n_valid), emit partial sum.
        row = (pl.program_id(0) * tile_n
               + jax.lax.broadcasted_iota(jnp.int32, (tile_n, 1), 0))
        out_refs[oi][0, 0] = jnp.sum(jnp.where(row < n_valid, nll, 0.0))


def bigram_forward(idx, targets, table_p, vocab_size, *, return_logits=True,
                   pad_logits_ok=False):
    """Forward pass mirroring BigramLangaugeModel.forward(idx, targets).

    idx, targets  : (B, T) int token ids (targets may be None)
    table_p       : padded table from pad_embedding_table()  -> (Vp, Vp) float32
    return_logits : False -> loss-only fast path (no logits HBM writeback)
    pad_logits_ok : True  -> return the padded (Np, Vp) logits without the
                    slice/reshape copy (padded cols are -1e30, padded rows are
                    garbage row-0 gathers; caller must ignore rows >= B*T)
    returns (logits, loss) — logits is (B*T, V) when targets are given,
    (B, T, V) when targets is None (matching the PyTorch module), or None when
    return_logits=False; loss is a scalar f32 or None.
    """
    B, T = idx.shape
    V = vocab_size
    Vp = table_p.shape[1]
    N = B * T

    compute_loss = targets is not None
    write_logits = bool(return_logits)
    if not (compute_loss or write_logits):
        raise ValueError("nothing to compute: need targets and/or return_logits")

    pref_tile, vmem_cap = _device_tuning()

    # Large tiles amortize the ~0.35us/step overhead; keep >=2 tiles once N is
    # non-trivial so the "parallel" grid axis can use both v7x TensorCores.
    n8 = _round_up(N, 8)
    if n8 <= 256:
        tile_n = n8
    else:
        tile_n = min(pref_tile, _round_up((n8 + 1) // 2, 256))
    Np = _round_up(N, tile_n)
    num_tiles = Np // tile_n

    # Merge idx (+ tgt) into a single (Np, C) int32 input: one DMA per step.
    in_cols = 2 if compute_loss else 1
    tok = idx.reshape(N, 1).astype(jnp.int32)
    if compute_loss:
        tok = jnp.concatenate(
            [tok, targets.reshape(N, 1).astype(jnp.int32)], axis=1)
    if Np > N:
        tok = jnp.pad(tok, ((0, Np - N), (0, 0)))

    out_shapes = []
    out_specs = []
    if write_logits:
        out_shapes.append(jax.ShapeDtypeStruct((Np, Vp), jnp.float32))
        out_specs.append(pl.BlockSpec((tile_n, Vp), lambda i: (i, 0)))
    if compute_loss:
        out_shapes.append(jax.ShapeDtypeStruct((num_tiles, 1), jnp.float32))
        out_specs.append(pl.BlockSpec((1, 1), lambda i: (i, 0),
                                      memory_space=pltpu.MemorySpace.SMEM))

    # VMEM budget from the actual footprint (no artificial floor): resident
    # table (double-buffered), double-buffered output tile, input tiles, plus
    # a generous bound on live (TILE_N, Vp) f32 intermediates and slack.
    table_bytes = Vp * Vp * 4
    out_tile_bytes = tile_n * Vp * 4 if write_logits else 0
    in_tile_bytes = tile_n * in_cols * 4
    interm_bytes = 6 * tile_n * Vp * 4
    vmem_limit = int(min(vmem_cap,
                         max(4 * 1024 * 1024,
                             2 * table_bytes + 2 * out_tile_bytes
                             + 2 * in_tile_bytes + interm_bytes + (2 << 20))))

    kernel = functools.partial(_bigram_kernel, n_valid=N,
                               compute_loss=compute_loss,
                               write_logits=write_logits)

    outs = pl.pallas_call(
        kernel,
        grid=(num_tiles,),
        out_shape=tuple(out_shapes),
        in_specs=[
            pl.BlockSpec((tile_n, in_cols), lambda i: (i, 0)),
            pl.BlockSpec((Vp, Vp), lambda i: (0, 0)),   # table resident in VMEM
        ],
        out_specs=tuple(out_specs),
        compiler_params=pltpu.CompilerParams(
            dimension_semantics=("parallel",),          # independent tiles
            vmem_limit_bytes=vmem_limit,
        ),
    )(tok, table_p)

    oi = 0
    logits = None
    if write_logits:
        logits_p = outs[oi]
        oi += 1
        if pad_logits_ok:
            logits = logits_p                            # (Np, Vp), no copy
        elif compute_loss:
            logits = logits_p[:N, :V]                    # PyTorch's (B*T, V) view
        else:
            logits = logits_p[:N, :V].reshape(B, T, V)

    loss = None
    if compute_loss:
        loss = jnp.sum(outs[oi]) / jnp.float32(N)

    return logits, loss


def bigram_forward_ref(idx, targets, table):
    """Pure-JAX reference mirroring the PyTorch module exactly."""
    logits3 = table[idx]                                  # (B, T, V)
    if targets is None:
        return logits3, None
    B, T, V = logits3.shape
    lf = logits3.reshape(B * T, V)
    tf = targets.reshape(B * T)
    lse = jax.scipy.special.logsumexp(lf, axis=-1)
    picked = jnp.take_along_axis(lf, tf[:, None], axis=-1)[:, 0]
    return lf, jnp.mean(lse - picked)


if __name__ == "__main__":
    key = jax.random.PRNGKey(0)
    k_tab, k_idx, k_tgt, k_idx2, k_tgt2 = jax.random.split(key, 5)

    vocab_size = 65        # e.g. tiny-shakespeare char vocab
    B, T = 2, 8

    # nn.Embedding default init: N(0, 1)
    table = jax.random.normal(k_tab, (vocab_size, vocab_size), dtype=jnp.float32)
    idx = jax.random.randint(k_idx, (B, T), 0, vocab_size, dtype=jnp.int32)
    targets = jax.random.randint(k_tgt, (B, T), 0, vocab_size, dtype=jnp.int32)

    # Table padding hoisted out of the per-call path: do it once at "init".
    table_p = pad_embedding_table(table)

    # 1) logits + loss (PyTorch returns the (B*T, V) view when targets given).
    logits, loss = bigram_forward(idx, targets, table_p, vocab_size)
    jax.block_until_ready((logits, loss))
    logits_ref, loss_ref = bigram_forward_ref(idx, targets, table)
    assert logits.shape == (B * T, vocab_size)
    assert jnp.allclose(logits, logits_ref, atol=1e-5, rtol=1e-5)
    assert jnp.allclose(loss, loss_ref, atol=1e-5, rtol=1e-5)

    # 2) loss-only fast path (no logits writeback at all).
    _, loss_only = bigram_forward(idx, targets, table_p, vocab_size,
                                  return_logits=False)
    jax.block_until_ready(loss_only)
    assert jnp.allclose(loss_only, loss_ref, atol=1e-5, rtol=1e-5)

    # 3) targets=None path: logits only (B, T, V), no tgt DMA / CE math / loss.
    logits_nt, loss_nt = bigram_forward(idx, None, table_p, vocab_size)
    jax.block_until_ready(logits_nt)
    assert loss_nt is None
    logits3_ref, _ = bigram_forward_ref(idx, None, table)
    assert logits_nt.shape == (B, T, vocab_size)
    assert jnp.allclose(logits_nt, logits3_ref, atol=1e-5, rtol=1e-5)

    # 4) multi-tile path: N=615 -> tile_n=512, 2 grid steps, padded-row masking.
    B2, T2 = 5, 123
    idx2 = jax.random.randint(k_idx2, (B2, T2), 0, vocab_size, dtype=jnp.int32)
    tgt2 = jax.random.randint(k_tgt2, (B2, T2), 0, vocab_size, dtype=jnp.int32)
    logits2, loss2 = bigram_forward(idx2, tgt2, table_p, vocab_size)
    jax.block_until_ready((logits2, loss2))
    logits2_ref, loss2_ref = bigram_forward_ref(idx2, tgt2, table)
    assert jnp.allclose(logits2, logits2_ref, atol=1e-5, rtol=1e-5)
    assert jnp.allclose(loss2, loss2_ref, atol=1e-5, rtol=1e-5)

    # TODO(synk): generate() uses torch.multinomial autoregressive sampling; that
    # loop stays host-side in JAX and is not part of the Pallas kernel.
    print("KERNEL_OK")
</pallas_src>

<mosaic_0001>
module attributes {stable_mosaic.version = 11 : i64} {
  func.func @_bigram_kernel(%arg0: i32, %arg1: memref<16x2xi32, #tpu.memory_space<vmem>>, %arg2: memref<128x128xf32, #tpu.memory_space<vmem>>, %arg3: memref<16x128xf32, #tpu.memory_space<vmem>>, %arg4: memref<1x1xf32, #tpu.memory_space<smem>>) attributes {dimension_semantics = [#tpu.dimension_semantics<parallel>], iteration_bounds = array<i64: 1>, scalar_prefetch = 0 : i64, scratch_operands = 0 : i64, tpu.core_type = #tpu.core_type<tc>, window_params = [{transform_indices = @transform_0, window_bounds = array<i64: 16, 2>}, {pipeline_mode = #tpu.pipeline_mode<synchronous>, transform_indices = @transform_1, window_bounds = array<i64: 128, 128>}, {transform_indices = @transform_2, window_bounds = array<i64: 16, 128>}, {transform_indices = @transform_3, window_bounds = array<i64: 1, 1>}]} {
    %c0 = arith.constant 0 : index
    %c0_0 = arith.constant 0 : index
    %0 = vector.load %arg1[%c0, %c0_0] : memref<16x2xi32, #tpu.memory_space<vmem>>, vector<16x1xi32>
    %1 = tpu.iota {dimensions = array<i32: 1>} : vector<16x128xi32>
    %2 = vector.broadcast %0 : vector<16x1xi32> to vector<16x128xi32>
    %3 = arith.cmpi eq, %1, %2 : vector<16x128xi32>
    %4 = arith.extui %3 : vector<16x128xi1> to vector<16x128xi32>
    %5 = arith.sitofp %4 : vector<16x128xi32> to vector<16x128xf32>
    %c0_1 = arith.constant 0 : index
    %c0_2 = arith.constant 0 : index
    %6 = vector.load %arg2[%c0_1, %c0_2] : memref<128x128xf32, #tpu.memory_space<vmem>>, vector<128x128xf32>
    %cst = arith.constant dense<0.000000e+00> : vector<16x128xf32>
    %7 = tpu.matmul %5, %6, %cst {dimension_numbers = #tpu.dot_dimension_numbers<[1], [0], [0], [1], [0, 0, 1, 1], [], []>, precision = #tpu.contract_precision<fp32>} : vector<16x128xf32>, vector<128x128xf32>, vector<16x128xf32> -> vector<16x128xf32>
    %c0_3 = arith.constant 0 : index
    %c0_4 = arith.constant 0 : index
    %8 = vector.load %arg3[%c0_3, %c0_4] : memref<16x128xf32, #tpu.memory_space<vmem>>, vector<16x128xf32>
    tpu.vector_store %arg3[%c0_3, %c0_4], %7 {strides = array<i32>} : memref<16x128xf32, #tpu.memory_space<vmem>>, vector<16x128xf32>,
    %c0_5 = arith.constant 0 : index
    %c1 = arith.constant 1 : index
    %9 = vector.load %arg1[%c0_5, %c1] : memref<16x2xi32, #tpu.memory_space<vmem>>, vector<16x1xi32>
    %cst_6 = arith.constant dense<0xFF800000> : vector<16xf32>
    %10 = vector.multi_reduction <maximumf>, %7, %cst_6 [1] : vector<16x128xf32> to vector<16xf32>
    %11 = vector.shape_cast %10 : vector<16xf32> to vector<16x1xf32>
    %12 = vector.broadcast %11 : vector<16x1xf32> to vector<16x128xf32>
    %13 = arith.subf %7, %12 : vector<16x128xf32>
    %14 = math.exp %13 : vector<16x128xf32>
    %cst_7 = arith.constant dense<0.000000e+00> : vector<16xf32>
    %15 = vector.multi_reduction <add>, %14, %cst_7 [1] : vector<16x128xf32> to vector<16xf32>
    %16 = vector.shape_cast %15 : vector<16xf32> to vector<16x1xf32>
    %17 = math.log %16 : vector<16x1xf32>
    %18 = arith.addf %17, %11 : vector<16x1xf32>
    %19 = vector.broadcast %9 : vector<16x1xi32> to vector<16x128xi32>
    %20 = arith.cmpi eq, %1, %19 : vector<16x128xi32>
    %cst_8 = arith.constant 0.000000e+00 : f32
    %21 = vector.broadcast %cst_8 : f32 to vector<16x128xf32>
    %22 = arith.select %20, %7, %21 : vector<16x128xi1>, vector<16x128xf32>
    %cst_9 = arith.constant dense<0.000000e+00> : vector<16xf32>
    %23 = vector.multi_reduction <add>, %22, %cst_9 [1] : vector<16x128xf32> to vector<16xf32>
    %24 = vector.shape_cast %23 : vector<16xf32> to vector<16x1xf32>
    %25 = arith.subf %18, %24 : vector<16x1xf32>
    %c16_i32 = arith.constant 16 : i32
    %26 = arith.muli %arg0, %c16_i32 : i32
    %27 = tpu.iota {dimensions = array<i32: 0>} : vector<16x1xi32>
    %28 = vector.broadcast %26 : i32 to vector<16x1xi32>
    %29 = arith.addi %28, %27 : vector<16x1xi32>
    %c16_i32_10 = arith.constant 16 : i32
    %30 = vector.broadcast %c16_i32_10 : i32 to vector<16x1xi32>
    %31 = arith.cmpi slt, %29, %30 : vector<16x1xi32>
    %cst_11 = arith.constant 0.000000e+00 : f32
    %32 = vector.broadcast %cst_11 : f32 to vector<16x1xf32>
    %33 = arith.select %31, %25, %32 : vector<16x1xi1>, vector<16x1xf32>
    %34 = vector.shape_cast %33 : vector<16x1xf32> to vector<1x16x1xf32>
    %cst_12 = arith.constant dense<0.000000e+00> : vector<1xf32>
    %35 = vector.multi_reduction <add>, %34, %cst_12 [1, 2] : vector<1x16x1xf32> to vector<1xf32>
    %36 = vector.shape_cast %35 : vector<1xf32> to vector<1x1x1xf32>
    %37 = vector.extract %36[0, 0, 0] : f32 from vector<1x1x1xf32>
    %c0_13 = arith.constant 0 : index
    %c0_14 = arith.constant 0 : index
    %38 = memref.load %arg4[%c0_13, %c0_14] : memref<1x1xf32, #tpu.memory_space<smem>>
    memref.store %37, %arg4[%c0_13, %c0_14] : memref<1x1xf32, #tpu.memory_space<smem>>
    return
  }
  func.func @transform_0(%arg0: i32) -> (i32, i32) {
    %c0_i32 = arith.constant 0 : i32
    %c0_i32_0 = arith.constant 0 : i32
    return %arg0, %c0_i32 : i32, i32
  }
  func.func @transform_1(%arg0: i32) -> (i32, i32) {
    %c0_i32 = arith.constant 0 : i32
    %c0_i32_0 = arith.constant 0 : i32
    %c0_i32_1 = arith.constant 0 : i32
    return %c0_i32, %c0_i32_0 : i32, i32
  }
  func.func @transform_2(%arg0: i32) -> (i32, i32) {
    %c0_i32 = arith.constant 0 : i32
    %c0_i32_0 = arith.constant 0 : i32
    return %arg0, %c0_i32 : i32, i32
  }
  func.func @transform_3(%arg0: i32) -> (i32, i32) {
    %c0_i32 = arith.constant 0 : i32
    %c0_i32_0 = arith.constant 0 : i32
    return %arg0, %c0_i32 : i32, i32
  }
}

</mosaic_0001>

<llo_original>
// kernel: tpu_custom_call.1
$region0: #{tpu_custom_call.1}
  #allocation0 [shape = 'u32[]', space=smem, size = 0x4, offset = 0x4, fixed_abs, tag = 'smem constant byte address 0x4 - core index']
  #allocation1 [shape = 'u32[144,128]{1,0:T(1,128)}', space=vmem, size = 0x12000, scoped, tag = 'internal scratch']
  %s0 = inlined_call_operand.vmem [shape: s32[16,2], index: 0, kind: input, shape index: {}]
  %s1 = inlined_call_operand.hbm [shape: f32[128,128], index: 1, kind: input, shape index: {}]
  %s2 = inlined_call_operand.hbm [shape: f32[16,128], index: 2, kind: output, shape index: {0}]
  %s3 = inlined_call_operand.hbm [shape: f32[1,1], index: 3, kind: output, shape index: {1}]
  %4 = xla_tuple %s2, %s3
  %s5 = sld [smem:[#allocation0]]
  $region30: #{tpu_custom_call.1} parent=0
    _
  %s7 = ssub.s32 1, %s5
  %s8 = scalar_select 0, %s7, %s5
  $region1: #{tpu_custom_call.1} parent=0
    #allocation2 [shape = 'u8[65536]{0}', space=vmem, size = 0x10000, scoped, tag = 'input window, operand 1, single buffered']
    #allocation3 [shape = 's32[1]{0}', space=sflag, size = 0x4, scoped, tag = 'scoped memory for tpu_custom_call.1']
    #allocation4 [shape = 's32[1]{0}', space=sflag, size = 0x4, scoped, tag = 'scoped memory for tpu_custom_call.1']
    #allocation5 [shape = 's32[1]{0}', space=sflag, size = 0x4, scoped, tag = 'scoped memory for tpu_custom_call.1']
    #allocation6 [shape = 'u8[8192]{0}', space=vmem, size = 0x2000, scoped, tag = 'output window, operand 0, single buffered']
    #allocation7 [shape = 'u8[512]{0}', space=smem, size = 0x200, scoped, tag = 'output window, operand 1, single buffered']
    %9 = vsyncpa [#allocation3], 0
    %10 = vsyncpa [#allocation4], 0
    %11 = vsyncpa [#allocation5], 0
    // Predicated region
    $region2: #{tpu_custom_call.1} parent=1 // pred_check
      _
    $region3: #{tpu_custom_call.1} parent=1 // pred_check_branch
      %13 = sbr.rel (0) target = $region5
    $region4: #{tpu_custom_call.1} parent=1 // pred_region
      _
    $region5: #{tpu_custom_call.1} parent=1 // pred_fallthru
      _
    // Predicated region
    $region6: #{tpu_custom_call.1} parent=1 // pred_check
      _
    $region7: #{tpu_custom_call.1} parent=1 // pred_check_branch
      %15 = sbr.rel (0) target = $region9
    $region8: #{tpu_custom_call.1} parent=1 // pred_region
      %s17 = ssub.s32 2048, 2048
      %18 = vsyncadd [#allocation3], %s17
      %s19 = sshll.u32 [#allocation2], 4
      %s20 = int_to_ptr.vmem [resolvable:$true] %s19
      %25 = dma.hbm_to_vmem [thread:$0]  %s1, 2048, %s20, [#allocation3], 128, 128, 8
    $region9: #{tpu_custom_call.1} parent=1 // pred_fallthru
      _
    // Predicated region
    $region10: #{tpu_custom_call.1} parent=1 // pred_check
      _
    $region11: #{tpu_custom_call.1} parent=1 // pred_check_branch
      %27 = sbr.rel (0) target = $region13
    $region12: #{tpu_custom_call.1} parent=1 // pred_region
      %28 = dma.done [#allocation3], 2048
    $region13: #{tpu_custom_call.1} parent=1 // pred_fallthru
      _
    %v29 = vld [vmem:[%s0] sm:$0xff]
    %v30 = vld [vmem:[%s0 + $0x8] sm:$0xff]
    %v31 = vlaneseq
    %v32 = vand.u32 %v31, 127
    %33 = vset.pattern.permute.xlu0 0
    %34 = vperm.xlu0 %33, %v29
    %v35 = vpop.permute.xlu0 %34
    %36 = vset.pattern.permute.xlu0 0
    %37 = vperm.xlu0 %36, %v30
    %v38 = vpop.permute.xlu0 %37
    %vm39 = vcmp.eq.s32.totalorder %v32, %v35
    %vm40 = vcmp.eq.s32.totalorder %v32, %v38
    %v41 = vsel %vm39, 1, 0
    %v42 = vsel %vm40, 1, 0
    %v43 = vcvt.s32.f32 %v41
    %v44 = vcvt.s32.f32 %v42
    %v45 = vld [vmem:[#allocation2] sm:$0xff]
    %v46 = vld [vmem:[#allocation2 + $0x8] sm:$0xff]
    %v47 = vld [vmem:[#allocation2 + $0x10] sm:$0xff]
    %v48 = vld [vmem:[#allocation2 + $0x18] sm:$0xff]
    %v49 = vld [vmem:[#allocation2 + $0x20] sm:$0xff]
    %v50 = vld [vmem:[#allocation2 + $0x28] sm:$0xff]
    %v51 = vld [vmem:[#allocation2 + $0x30] sm:$0xff]
    %v52 = vld [vmem:[#allocation2 + $0x38] sm:$0xff]
    %v53 = vld [vmem:[#allocation2 + $0x40] sm:$0xff]
    %v54 = vld [vmem:[#allocation2 + $0x48] sm:$0xff]
    %v55 = vld [vmem:[#allocation2 + $0x50] sm:$0xff]
    %v56 = vld [vmem:[#allocation2 + $0x58] sm:$0xff]
    %v57 = vld [vmem:[#allocation2 + $0x60] sm:$0xff]
    %v58 = vld [vmem:[#allocation2 + $0x68] sm:$0xff]
    %v59 = vld [vmem:[#allocation2 + $0x70] sm:$0xff]
    %v60 = vld [vmem:[#allocation2 + $0x78] sm:$0xff]
    %61 = vmatprep.subr.mxu0 0.0
    %v62 = vand.u32 %v45, 4294901760
    %63 = vmatpush1.msra.mxu0 %v62
    %64 = vmatprep.subr.mxu0 0.0
    %v65 = vand.u32 %v46, 4294901760
    %66 = vmatpush1.msra.mxu0 %v65
    %67 = vmatprep.subr.mxu0 0.0
    %v68 = vand.u32 %v47, 4294901760
    %69 = vmatpush1.msra.mxu0 %v68
    %70 = vmatprep.subr.mxu0 0.0
    %v71 = vand.u32 %v48, 4294901760
    %72 = vmatpush1.msra.mxu0 %v71
    %73 = vmatprep.subr.mxu0 0.0
    %v74 = vand.u32 %v49, 4294901760
    %75 = vmatpush1.msra.mxu0 %v74
    %76 = vmatprep.subr.mxu0 0.0
    %v77 = vand.u32 %v50, 4294901760
    %78 = vmatpush1.msra.mxu0 %v77
    %79 = vmatprep.subr.mxu0 0.0
    %v80 = vand.u32 %v51, 4294901760
    %81 = vmatpush1.msra.mxu0 %v80
    %82 = vmatprep.subr.mxu0 0.0
    %v83 = vand.u32 %v52, 4294901760
    %84 = vmatpush1.msra.mxu0 %v83
    %85 = vmatprep.subr.mxu0 0.0
    %v86 = vand.u32 %v53, 4294901760
    %87 = vmatpush1.msra.mxu0 %v86
    %88 = vmatprep.subr.mxu0 0.0
    %v89 = vand.u32 %v54, 4294901760
    %90 = vmatpush1.msra.mxu0 %v89
    %91 = vmatprep.subr.mxu0 0.0
    %v92 = vand.u32 %v55, 4294901760
    %93 = vmatpush1.msra.mxu0 %v92
    %94 = vmatprep.subr.mxu0 0.0
    %v95 = vand.u32 %v56, 4294901760
    %96 = vmatpush1.msra.mxu0 %v95
    %97 = vmatprep.subr.mxu0 0.0
    %v98 = vand.u32 %v57, 4294901760
    %99 = vmatpush1.msra.mxu0 %v98
    %100 = vmatprep.subr.mxu0 0.0
    %v101 = vand.u32 %v58, 4294901760
    %102 = vmatpush1.msra.mxu0 %v101
    %103 = vmatprep.subr.mxu0 0.0
    %v104 = vand.u32 %v59, 4294901760
    %105 = vmatpush1.msra.mxu0 %v104
    %106 = vmatprep.subr.mxu0 0.0
    %v107 = vand.u32 %v60, 4294901760
    %108 = vmatpush1.msra.mxu0 %v107
    %109 = vmatprep.subr.mxu0 0.0
    %110 = vmatpush1.msra.mxu0 0.0
    %111 = vmatprep.subr.mxu0 0.0
    %112 = vmatpush1.msra.mxu0 0.0
    %113 = vmatprep.subr.mxu0 0.0
    %114 = vmatpush1.msra.mxu0 0.0
    %115 = vmatprep.subr.mxu0 0.0
    %116 = vmatpush1.msra.mxu0 0.0
    %117 = vmatprep.subr.mxu0 0.0
    %118 = vmatpush1.msra.mxu0 0.0
    %119 = vmatprep.subr.mxu0 0.0
    %120 = vmatpush1.msra.mxu0 0.0
    %121 = vmatprep.subr.mxu0 0.0
    %122 = vmatpush1.msra.mxu0 0.0
    %123 = vmatprep.subr.mxu0 0.0
    %124 = vmatpush1.msra.mxu0 0.0
    %125 = vmatprep.subr.mxu0 0.0
    %126 = vmatpush1.msra.mxu0 0.0
    %127 = vmatprep.subr.mxu0 0.0
    %128 = vmatpush1.msra.mxu0 0.0
    %129 = vmatprep.subr.mxu0 0.0
    %130 = vmatpush1.msra.mxu0 0.0
    %131 = vmatprep.subr.mxu0 0.0
    %132 = vmatpush1.msra.mxu0 0.0
    %133 = vmatprep.subr.mxu0 0.0
    %134 = vmatpush1.msra.mxu0 0.0
    %135 = vmatprep.subr.mxu0 0.0
    %136 = vmatpush1.msra.mxu0 0.0
    %137 = vmatprep.subr.mxu0 0.0
    %138 = vmatpush1.msra.mxu0 0.0
    %139 = vmatprep.subr.mxu0 0.0
    %140 = vmatpush1.msra.mxu0 0.0
    %141 = vmatprep.mubr.f32.mxu0 0.0
    %v142 = vand.u32 %v43, 4294901760
    %v143 = vsub.f32 %v43, %v142
    %v144 = vand.u32 %v143, 4294901760
    %v145 = vsub.f32 %v143, %v144
    %v146 = vand.u32 %v145, 4294901760
    %147 = vmatmul.mubr.f32.gmra.mrb[0].mxu0 %v146
    %v148 = vpop.f32.mrb[0].mxu0
    %v149 = vadd.f32 0.0, %v148
    %v150 = vpop.f32.mrb[0].mxu0
    %151 = vmatprep.mubr.f32.mxu0 0.0
    %v152 = vand.u32 %v44, 4294901760
    %v153 = vsub.f32 %v44, %v152
    %v154 = vand.u32 %v153, 4294901760
    %v155 = vsub.f32 %v153, %v154
    %v156 = vand.u32 %v155, 4294901760
    %157 = vmatmul.mubr.f32.gmra.mrb[0].mxu0 %v156
    %v158 = vpop.f32.mrb[0].mxu0
    %v159 = vadd.f32 0.0, %v158
    %v160 = vpop.f32.mrb[0].mxu0
    %161 = vdwg.mxu0
    %162 = vmatprep.subr.mxu0 0.0
    %v163 = vand.u32 %v45, 4294901760
    %v164 = vsub.f32 %v45, %v163
    %v165 = vand.u32 %v164, 4294901760
    %v166 = vsub.f32 %v164, %v165
    %v167 = vand.u32 %v166, 4294901760
    %168 = vmatpush1.msra.mxu0 %v167
    %169 = vmatprep.subr.mxu0 0.0
    %v170 = vand.u32 %v46, 4294901760
    %v171 = vsub.f32 %v46, %v170
    %v172 = vand.u32 %v171, 4294901760
    %v173 = vsub.f32 %v171, %v172
    %v174 = vand.u32 %v173, 4294901760
    %175 = vmatpush1.msra.mxu0 %v174
    %176 = vmatprep.subr.mxu0 0.0
    %v177 = vand.u32 %v47, 4294901760
    %v178 = vsub.f32 %v47, %v177
    %v179 = vand.u32 %v178, 4294901760
    %v180 = vsub.f32 %v178, %v179
    %v181 = vand.u32 %v180, 4294901760
    %182 = vmatpush1.msra.mxu0 %v181
    %183 = vmatprep.subr.mxu0 0.0
    %v184 = vand.u32 %v48, 4294901760
    %v185 = vsub.f32 %v48, %v184
    %v186 = vand.u32 %v185, 4294901760
    %v187 = vsub.f32 %v185, %v186
    %v188 = vand.u32 %v187, 4294901760
    %189 = vmatpush1.msra.mxu0 %v188
    %190 = vmatprep.subr.mxu0 0.0
    %v191 = vand.u32 %v49, 4294901760
    %v192 = vsub.f32 %v49, %v191
    %v193 = vand.u32 %v192, 4294901760
    %v194 = vsub.f32 %v192, %v193
    %v195 = vand.u32 %v194, 4294901760
    %196 = vmatpush1.msra.mxu0 %v195
    %197 = vmatprep.subr.mxu0 0.0
    %v198 = vand.u32 %v50, 4294901760
    %v199 = vsub.f32 %v50, %v198
    %v200 = vand.u32 %v199, 4294901760
    %v201 = vsub.f32 %v199, %v200
    %v202 = vand.u32 %v201, 4294901760
    %203 = vmatpush1.msra.mxu0 %v202
    %204 = vmatprep.subr.mxu0 0.0
    %v205 = vand.u32 %v51, 4294901760
    %v206 = vsub.f32 %v51, %v205
    %v207 = vand.u32 %v206, 4294901760
    %v208 = vsub.f32 %v206, %v207
    %v209 = vand.u32 %v208, 4294901760
    %210 = vmatpush1.msra.mxu0 %v209
    %211 = vmatprep.subr.mxu0 0.0
    %v212 = vand.u32 %v52, 4294901760
    %v213 = vsub.f32 %v52, %v212
    %v214 = vand.u32 %v213, 4294901760
    %v215 = vsub.f32 %v213, %v214
    %v216 = vand.u32 %v215, 4294901760
    %217 = vmatpush1.msra.mxu0 %v216
    %218 = vmatprep.subr.mxu0 0.0
    %v219 = vand.u32 %v53, 4294901760
    %v220 = vsub.f32 %v53, %v219
    %v221 = vand.u32 %v220, 4294901760
    %v222 = vsub.f32 %v220, %v221
    %v223 = vand.u32 %v222, 4294901760
    %224 = vmatpush1.msra.mxu0 %v223
    %225 = vmatprep.subr.mxu0 0.0
    %v226 = vand.u32 %v54, 4294901760
    %v227 = vsub.f32 %v54, %v226
    %v228 = vand.u32 %v227, 4294901760
    %v229 = vsub.f32 %v227, %v228
    %v230 = vand.u32 %v229, 4294901760
    %231 = vmatpush1.msra.mxu0 %v230
    %232 = vmatprep.subr.mxu0 0.0
    %v233 = vand.u32 %v55, 4294901760
    %v234 = vsub.f32 %v55, %v233
    %v235 = vand.u32 %v234, 4294901760
    %v236 = vsub.f32 %v234, %v235
    %v237 = vand.u32 %v236, 4294901760
    %238 = vmatpush1.msra.mxu0 %v237
    %239 = vmatprep.subr.mxu0 0.0
    %v240 = vand.u32 %v56, 4294901760
    %v241 = vsub.f32 %v56, %v240
    %v242 = vand.u32 %v241, 4294901760
    %v243 = vsub.f32 %v241, %v242
    %v244 = vand.u32 %v243, 4294901760
    %245 = vmatpush1.msra.mxu0 %v244
    %246 = vmatprep.subr.mxu0 0.0
    %v247 = vand.u32 %v57, 4294901760
    %v248 = vsub.f32 %v57, %v247
    %v249 = vand.u32 %v248, 4294901760
    %v250 = vsub.f32 %v248, %v249
    %v251 = vand.u32 %v250, 4294901760
    %252 = vmatpush1.msra.mxu0 %v251
    %253 = vmatprep.subr.mxu0 0.0
    %v254 = vand.u32 %v58, 4294901760
    %v255 = vsub.f32 %v58, %v254
    %v256 = vand.u32 %v255, 4294901760
    %v257 = vsub.f32 %v255, %v256
    %v258 = vand.u32 %v257, 4294901760
    %259 = vmatpush1.msra.mxu0 %v258
    %260 = vmatprep.subr.mxu0 0.0
    %v261 = vand.u32 %v59, 4294901760
    %v262 = vsub.f32 %v59, %v261
    %v263 = vand.u32 %v262, 4294901760
    %v264 = vsub.f32 %v262, %v263
    %v265 = vand.u32 %v264, 4294901760
    %266 = vmatpush1.msra.mxu0 %v265
    %267 = vmatprep.subr.mxu0 0.0
    %v268 = vand.u32 %v60, 4294901760
    %v269 = vsub.f32 %v60, %v268
    %v270 = vand.u32 %v269, 4294901760
    %v271 = vsub.f32 %v269, %v270
    %v272 = vand.u32 %v271, 4294901760
    %273 = vmatpush1.msra.mxu0 %v272
    %274 = vmatprep.subr.mxu0 0.0
    %275 = vmatpush1.msra.mxu0 0.0
    %276 = vmatprep.subr.mxu0 0.0
    %277 = vmatpush1.msra.mxu0 0.0
    %278 = vmatprep.subr.mxu0 0.0
    %279 = vmatpush1.msra.mxu0 0.0
    %280 = vmatprep.subr.mxu0 0.0
    %281 = vmatpush1.msra.mxu0 0.0
    %282 = vmatprep.subr.mxu0 0.0
    %283 = vmatpush1.msra.mxu0 0.0
    %284 = vmatprep.subr.mxu0 0.0
    %285 = vmatpush1.msra.mxu0 0.0
    %286 = vmatprep.subr.mxu0 0.0
    %287 = vmatpush1.msra.mxu0 0.0
    %288 = vmatprep.subr.mxu0 0.0
    %289 = vmatpush1.msra.mxu0 0.0
    %290 = vmatprep.subr.mxu0 0.0
    %291 = vmatpush1.msra.mxu0 0.0
    %292 = vmatprep.subr.mxu0 0.0
    %293 = vmatpush1.msra.mxu0 0.0
    %294 = vmatprep.subr.mxu0 0.0
    %295 = vmatpush1.msra.mxu0 0.0
    %296 = vmatprep.subr.mxu0 0.0
    %297 = vmatpush1.msra.mxu0 0.0
    %298 = vmatprep.subr.mxu0 0.0
    %299 = vmatpush1.msra.mxu0 0.0
    %300 = vmatprep.subr.mxu0 0.0
    %301 = vmatpush1.msra.mxu0 0.0
    %302 = vmatprep.subr.mxu0 0.0
    %303 = vmatpush1.msra.mxu0 0.0
    %304 = vmatprep.subr.mxu0 0.0
    %305 = vmatpush1.msra.mxu0 0.0
    %306 = vmatprep.mubr.f32.mxu0 0.0
    %v307 = vand.u32 %v43, 4294901760
    %308 = vmatmul.mubr.f32.gmra.mrb[0].mxu0 %v307
    %v309 = vpop.f32.mrb[0].mxu0
    %v310 = vadd.f32 %v149, %v309
    %v311 = vpop.f32.mrb[0].mxu0
    %312 = vmatprep.mubr.f32.mxu0 0.0
    %v313 = vand.u32 %v44, 4294901760
    %314 = vmatmul.mubr.f32.gmra.mrb[0].mxu0 %v313
    %v315 = vpop.f32.mrb[0].mxu0
    %v316 = vadd.f32 %v159, %v315
    %v317 = vpop.f32.mrb[0].mxu0
    %318 = vdwg.mxu0
    %319 = vmatprep.subr.mxu0 0.0
    %v320 = vand.u32 %v45, 4294901760
    %v321 = vsub.f32 %v45, %v320
    %322 = vmatpush1.msra.mxu0 %v321
    %323 = vmatprep.subr.mxu0 0.0
    %v324 = vand.u32 %v46, 4294901760
    %v325 = vsub.f32 %v46, %v324
    %326 = vmatpush1.msra.mxu0 %v325
    %327 = vmatprep.subr.mxu0 0.0
    %v328 = vand.u32 %v47, 4294901760
    %v329 = vsub.f32 %v47, %v328
    %330 = vmatpush1.msra.mxu0 %v329
    %331 = vmatprep.subr.mxu0 0.0
    %v332 = vand.u32 %v48, 4294901760
    %v333 = vsub.f32 %v48, %v332
    %334 = vmatpush1.msra.mxu0 %v333
    %335 = vmatprep.subr.mxu0 0.0
    %v336 = vand.u32 %v49, 4294901760
    %v337 = vsub.f32 %v49, %v336
    %338 = vmatpush1.msra.mxu0 %v337
    %339 = vmatprep.subr.mxu0 0.0
    %v340 = vand.u32 %v50, 4294901760
    %v341 = vsub.f32 %v50, %v340
    %342 = vmatpush1.msra.mxu0 %v341
    %343 = vmatprep.subr.mxu0 0.0
    %v344 = vand.u32 %v51, 4294901760
    %v345 = vsub.f32 %v51, %v344
    %346 = vmatpush1.msra.mxu0 %v345
    %347 = vmatprep.subr.mxu0 0.0
    %v348 = vand.u32 %v52, 4294901760
    %v349 = vsub.f32 %v52, %v348
    %350 = vmatpush1.msra.mxu0 %v349
    %351 = vmatprep.subr.mxu0 0.0
    %v352 = vand.u32 %v53, 4294901760
    %v353 = vsub.f32 %v53, %v352
    %354 = vmatpush1.msra.mxu0 %v353
    %355 = vmatprep.subr.mxu0 0.0
    %v356 = vand.u32 %v54, 4294901760
    %v357 = vsub.f32 %v54, %v356
    %358 = vmatpush1.msra.mxu0 %v357
    %359 = vmatprep.subr.mxu0 0.0
    %v360 = vand.u32 %v55, 4294901760
    %v361 = vsub.f32 %v55, %v360
    %362 = vmatpush1.msra.mxu0 %v361
    %363 = vmatprep.subr.mxu0 0.0
    %v364 = vand.u32 %v56, 4294901760
    %v365 = vsub.f32 %v56, %v364
    %366 = vmatpush1.msra.mxu0 %v365
    %367 = vmatprep.subr.mxu0 0.0
    %v368 = vand.u32 %v57, 4294901760
    %v369 = vsub.f32 %v57, %v368
    %370 = vmatpush1.msra.mxu0 %v369
    %371 = vmatprep.subr.mxu0 0.0
    %v372 = vand.u32 %v58, 4294901760
    %v373 = vsub.f32 %v58, %v372
    %374 = vmatpush1.msra.mxu0 %v373
    %375 = vmatprep.subr.mxu0 0.0
    %v376 = vand.u32 %v59, 4294901760
    %v377 = vsub.f32 %v59, %v376
    %378 = vmatpush1.msra.mxu0 %v377
    %379 = vmatprep.subr.mxu0 0.0
    %v380 = vand.u32 %v60, 4294901760
    %v381 = vsub.f32 %v60, %v380
    %382 = vmatpush1.msra.mxu0 %v381
    %383 = vmatprep.subr.mxu0 0.0
    %384 = vmatpush1.msra.mxu0 0.0
    %385 = vmatprep.subr.mxu0 0.0
    %386 = vmatpush1.msra.mxu0 0.0
    %387 = vmatprep.subr.mxu0 0.0
    %388 = vmatpush1.msra.mxu0 0.0
    %389 = vmatprep.subr.mxu0 0.0
    %390 = vmatpush1.msra.mxu0 0.0
    %391 = vmatprep.subr.mxu0 0.0
    %392 = vmatpush1.msra.mxu0 0.0
    %393 = vmatprep.subr.mxu0 0.0
    %394 = vmatpush1.msra.mxu0 0.0
    %395 = vmatprep.subr.mxu0 0.0
    %396 = vmatpush1.msra.mxu0 0.0
    %397 = vmatprep.subr.mxu0 0.0
    %398 = vmatpush1.msra.mxu0 0.0
    %399 = vmatprep.subr.mxu0 0.0
    %400 = vmatpush1.msra.mxu0 0.0
    %401 = vmatprep.subr.mxu0 0.0
    %402 = vmatpush1.msra.mxu0 0.0
    %403 = vmatprep.subr.mxu0 0.0
    %404 = vmatpush1.msra.mxu0 0.0
    %405 = vmatprep.subr.mxu0 0.0
    %406 = vmatpush1.msra.mxu0 0.0
    %407 = vmatprep.subr.mxu0 0.0
    %408 = vmatpush1.msra.mxu0 0.0
    %409 = vmatprep.subr.mxu0 0.0
    %410 = vmatpush1.msra.mxu0 0.0
    %411 = vmatprep.subr.mxu0 0.0
    %412 = vmatpush1.msra.mxu0 0.0
    %413 = vmatprep.subr.mxu0 0.0
    %414 = vmatpush1.msra.mxu0 0.0
    %415 = vmatprep.mubr.f32.mxu0 0.0
    %v416 = vand.u32 %v43, 4294901760
    %v417 = vsub.f32 %v43, %v416
    %418 = vmatmul.mubr.f32.gmra.mrb[0].mxu0 %v417
    %v419 = vpop.f32.mrb[0].mxu0
    %v420 = vadd.f32 %v310, %v419
    %v421 = vpop.f32.mrb[0].mxu0
    %422 = vmatprep.mubr.f32.mxu0 0.0
    %v423 = vand.u32 %v44, 4294901760
    %v424 = vsub.f32 %v44, %v423
    %425 = vmatmul.mubr.f32.gmra.mrb[0].mxu0 %v424
    %v426 = vpop.f32.mrb[0].mxu0
    %v427 = vadd.f32 %v316, %v426
    %v428 = vpop.f32.mrb[0].mxu0
    %429 = vdwg.mxu0
    %430 = vmatprep.subr.mxu0 0.0
    %v431 = vand.u32 %v45, 4294901760
    %432 = vmatpush1.msra.mxu0 %v431
    %433 = vmatprep.subr.mxu0 0.0
    %v434 = vand.u32 %v46, 4294901760
    %435 = vmatpush1.msra.mxu0 %v434
    %436 = vmatprep.subr.mxu0 0.0
    %v437 = vand.u32 %v47, 4294901760
    %438 = vmatpush1.msra.mxu0 %v437
    %439 = vmatprep.subr.mxu0 0.0
    %v440 = vand.u32 %v48, 4294901760
    %441 = vmatpush1.msra.mxu0 %v440
    %442 = vmatprep.subr.mxu0 0.0
    %v443 = vand.u32 %v49, 4294901760
    %444 = vmatpush1.msra.mxu0 %v443
    %445 = vmatprep.subr.mxu0 0.0
    %v446 = vand.u32 %v50, 4294901760
    %447 = vmatpush1.msra.mxu0 %v446
    %448 = vmatprep.subr.mxu0 0.0
    %v449 = vand.u32 %v51, 4294901760
    %450 = vmatpush1.msra.mxu0 %v449
    %451 = vmatprep.subr.mxu0 0.0
    %v452 = vand.u32 %v52, 4294901760
    %453 = vmatpush1.msra.mxu0 %v452
    %454 = vmatprep.subr.mxu0 0.0
    %v455 = vand.u32 %v53, 4294901760
    %456 = vmatpush1.msra.mxu0 %v455
    %457 = vmatprep.subr.mxu0 0.0
    %v458 = vand.u32 %v54, 4294901760
    %459 = vmatpush1.msra.mxu0 %v458
    %460 = vmatprep.subr.mxu0 0.0
    %v461 = vand.u32 %v55, 4294901760
    %462 = vmatpush1.msra.mxu0 %v461
    %463 = vmatprep.subr.mxu0 0.0
    %v464 = vand.u32 %v56, 4294901760
    %465 = vmatpush1.msra.mxu0 %v464
    %466 = vmatprep.subr.mxu0 0.0
    %v467 = vand.u32 %v57, 4294901760
    %468 = vmatpush1.msra.mxu0 %v467
    %469 = vmatprep.subr.mxu0 0.0
    %v470 = vand.u32 %v58, 4294901760
    %471 = vmatpush1.msra.mxu0 %v470
    %472 = vmatprep.subr.mxu0 0.0
    %v473 = vand.u32 %v59, 4294901760
    %474 = vmatpush1.msra.mxu0 %v473
    %475 = vmatprep.subr.mxu0 0.0
    %v476 = vand.u32 %v60, 4294901760
    %477 = vmatpush1.msra.mxu0 %v476
    %478 = vmatprep.subr.mxu0 0.0
    %479 = vmatpush1.msra.mxu0 0.0
    %480 = vmatprep.subr.mxu0 0.0
    %481 = vmatpush1.msra.mxu0 0.0
    %482 = vmatprep.subr.mxu0 0.0
    %483 = vmatpush1.msra.mxu0 0.0
    %484 = vmatprep.subr.mxu0 0.0
    %485 = vmatpush1.msra.mxu0 0.0
    %486 = vmatprep.subr.mxu0 0.0
    %487 = vmatpush1.msra.mxu0 0.0
    %488 = vmatprep.subr.mxu0 0.0
    %489 = vmatpush1.msra.mxu0 0.0
    %490 = vmatprep.subr.mxu0 0.0
    %491 = vmatpush1.msra.mxu0 0.0
    %492 = vmatprep.subr.mxu0 0.0
    %493 = vmatpush1.msra.mxu0 0.0
    %494 = vmatprep.subr.mxu0 0.0
    %495 = vmatpush1.msra.mxu0 0.0
    %496 = vmatprep.subr.mxu0 0.0
    %497 = vmatpush1.msra.mxu0 0.0
    %498 = vmatprep.subr.mxu0 0.0
    %499 = vmatpush1.msra.mxu0 0.0
    %500 = vmatprep.subr.mxu0 0.0
    %501 = vmatpush1.msra.mxu0 0.0
    %502 = vmatprep.subr.mxu0 0.0
    %503 = vmatpush1.msra.mxu0 0.0
    %504 = vmatprep.subr.mxu0 0.0
    %505 = vmatpush1.msra.mxu0 0.0
    %506 = vmatprep.subr.mxu0 0.0
    %507 = vmatpush1.msra.mxu0 0.0
    %508 = vmatprep.subr.mxu0 0.0
    %509 = vmatpush1.msra.mxu0 0.0
    %510 = vmatprep.mubr.f32.mxu0 0.0
    %v511 = vand.u32 %v43, 4294901760
    %v512 = vsub.f32 %v43, %v511
    %v513 = vand.u32 %v512, 4294901760
    %514 = vmatmul.mubr.f32.gmra.mrb[0].mxu0 %v513
    %v515 = vpop.f32.mrb[0].mxu0
    %v516 = vadd.f32 %v420, %v515
    %v517 = vpop.f32.mrb[0].mxu0
    %518 = vmatprep.mubr.f32.mxu0 0.0
    %v519 = vand.u32 %v44, 4294901760
    %v520 = vsub.f32 %v44, %v519
    %v521 = vand.u32 %v520, 4294901760
    %522 = vmatmul.mubr.f32.gmra.mrb[0].mxu0 %v521
    %v523 = vpop.f32.mrb[0].mxu0
    %v524 = vadd.f32 %v427, %v523
    %v525 = vpop.f32.mrb[0].mxu0
    %526 = vdwg.mxu0
    %527 = vmatprep.subr.mxu0 0.0
    %v528 = vand.u32 %v45, 4294901760
    %v529 = vsub.f32 %v45, %v528
    %v530 = vand.u32 %v529, 4294901760
    %531 = vmatpush1.msra.mxu0 %v530
    %532 = vmatprep.subr.mxu0 0.0
    %v533 = vand.u32 %v46, 4294901760
    %v534 = vsub.f32 %v46, %v533
    %v535 = vand.u32 %v534, 4294901760
    %536 = vmatpush1.msra.mxu0 %v535
    %537 = vmatprep.subr.mxu0 0.0
    %v538 = vand.u32 %v47, 4294901760
    %v539 = vsub.f32 %v47, %v538
    %v540 = vand.u32 %v539, 4294901760
    %541 = vmatpush1.msra.mxu0 %v540
    %542 = vmatprep.subr.mxu0 0.0
    %v543 = vand.u32 %v48, 4294901760
    %v544 = vsub.f32 %v48, %v543
    %v545 = vand.u32 %v544, 4294901760
    %546 = vmatpush1.msra.mxu0 %v545
    %547 = vmatprep.subr.mxu0 0.0
    %v548 = vand.u32 %v49, 4294901760
    %v549 = vsub.f32 %v49, %v548
    %v550 = vand.u32 %v549, 4294901760
    %551 = vmatpush1.msra.mxu0 %v550
    %552 = vmatprep.subr.mxu0 0.0
    %v553 = vand.u32 %v50, 4294901760
    %v554 = vsub.f32 %v50, %v553
    %v555 = vand.u32 %v554, 4294901760
    %556 = vmatpush1.msra.mxu0 %v555
    %557 = vmatprep.subr.mxu0 0.0
    %v558 = vand.u32 %v51, 4294901760
    %v559 = vsub.f32 %v51, %v558
    %v560 = vand.u32 %v559, 4294901760
    %561 = vmatpush1.msra.mxu0 %v560
    %562 = vmatprep.subr.mxu0 0.0
    %v563 = vand.u32 %v52, 4294901760
    %v564 = vsub.f32 %v52, %v563
    %v565 = vand.u32 %v564, 4294901760
    %566 = vmatpush1.msra.mxu0 %v565
    %567 = vmatprep.subr.mxu0 0.0
    %v568 = vand.u32 %v53, 4294901760
    %v569 = vsub.f32 %v53, %v568
    %v570 = vand.u32 %v569, 4294901760
    %571 = vmatpush1.msra.mxu0 %v570
    %572 = vmatprep.subr.mxu0 0.0
    %v573 = vand.u32 %v54, 4294901760
    %v574 = vsub.f32 %v54, %v573
    %v575 = vand.u32 %v574, 4294901760
    %576 = vmatpush1.msra.mxu0 %v575
    %577 = vmatprep.subr.mxu0 0.0
    %v578 = vand.u32 %v55, 4294901760
    %v579 = vsub.f32 %v55, %v578
    %v580 = vand.u32 %v579, 4294901760
    %581 = vmatpush1.msra.mxu0 %v580
    %582 = vmatprep.subr.mxu0 0.0
    %v583 = vand.u32 %v56, 4294901760
    %v584 = vsub.f32 %v56, %v583
    %v585 = vand.u32 %v584, 4294901760
    %586 = vmatpush1.msra.mxu0 %v585
    %587 = vmatprep.subr.mxu0 0.0
    %v588 = vand.u32 %v57, 4294901760
    %v589 = vsub.f32 %v57, %v588
    %v590 = vand.u32 %v589, 4294901760
    %591 = vmatpush1.msra.mxu0 %v590
    %592 = vmatprep.subr.mxu0 0.0
    %v593 = vand.u32 %v58, 4294901760
    %v594 = vsub.f32 %v58, %v593
    %v595 = vand.u32 %v594, 4294901760
    %596 = vmatpush1.msra.mxu0 %v595
    %597 = vmatprep.subr.mxu0 0.0
    %v598 = vand.u32 %v59, 4294901760
    %v599 = vsub.f32 %v59, %v598
    %v600 = vand.u32 %v599, 4294901760
    %601 = vmatpush1.msra.mxu0 %v600
    %602 = vmatprep.subr.mxu0 0.0
    %v603 = vand.u32 %v60, 4294901760
    %v604 = vsub.f32 %v60, %v603
    %v605 = vand.u32 %v604, 4294901760
    %606 = vmatpush1.msra.mxu0 %v605
    %607 = vmatprep.subr.mxu0 0.0
    %608 = vmatpush1.msra.mxu0 0.0
    %609 = vmatprep.subr.mxu0 0.0
    %610 = vmatpush1.msra.mxu0 0.0
    %611 = vmatprep.subr.mxu0 0.0
    %612 = vmatpush1.msra.mxu0 0.0
    %613 = vmatprep.subr.mxu0 0.0
    %614 = vmatpush1.msra.mxu0 0.0
    %615 = vmatprep.subr.mxu0 0.0
    %616 = vmatpush1.msra.mxu0 0.0
    %617 = vmatprep.subr.mxu0 0.0
    %618 = vmatpush1.msra.mxu0 0.0
    %619 = vmatprep.subr.mxu0 0.0
    %620 = vmatpush1.msra.mxu0 0.0
    %621 = vmatprep.subr.mxu0 0.0
    %622 = vmatpush1.msra.mxu0 0.0
    %623 = vmatprep.subr.mxu0 0.0
    %624 = vmatpush1.msra.mxu0 0.0
    %625 = vmatprep.subr.mxu0 0.0
    %626 = vmatpush1.msra.mxu0 0.0
    %627 = vmatprep.subr.mxu0 0.0
    %628 = vmatpush1.msra.mxu0 0.0
    %629 = vmatprep.subr.mxu0 0.0
    %630 = vmatpush1.msra.mxu0 0.0
    %631 = vmatprep.subr.mxu0 0.0
    %632 = vmatpush1.msra.mxu0 0.0
    %633 = vmatprep.subr.mxu0 0.0
    %634 = vmatpush1.msra.mxu0 0.0
    %635 = vmatprep.subr.mxu0 0.0
    %636 = vmatpush1.msra.mxu0 0.0
    %637 = vmatprep.subr.mxu0 0.0
    %638 = vmatpush1.msra.mxu0 0.0
    %639 = vmatprep.mubr.f32.mxu0 0.0
    %v640 = vand.u32 %v43, 4294901760
    %641 = vmatmul.mubr.f32.gmra.mrb[0].mxu0 %v640
    %v642 = vpop.f32.mrb[0].mxu0
    %v643 = vadd.f32 %v516, %v642
    %v644 = vpop.f32.mrb[0].mxu0
    %645 = vmatprep.mubr.f32.mxu0 0.0
    %v646 = vand.u32 %v44, 4294901760
    %647 = vmatmul.mubr.f32.gmra.mrb[0].mxu0 %v646
    %v648 = vpop.f32.mrb[0].mxu0
    %v649 = vadd.f32 %v524, %v648
    %v650 = vpop.f32.mrb[0].mxu0
    %651 = vdwg.mxu0
    %652 = vmatprep.subr.mxu0 0.0
    %v653 = vand.u32 %v45, 4294901760
    %654 = vmatpush1.msra.mxu0 %v653
    %655 = vmatprep.subr.mxu0 0.0
    %v656 = vand.u32 %v46, 4294901760
    %657 = vmatpush1.msra.mxu0 %v656
    %658 = vmatprep.subr.mxu0 0.0
    %v659 = vand.u32 %v47, 4294901760
    %660 = vmatpush1.msra.mxu0 %v659
    %661 = vmatprep.subr.mxu0 0.0
    %v662 = vand.u32 %v48, 4294901760
    %663 = vmatpush1.msra.mxu0 %v662
    %664 = vmatprep.subr.mxu0 0.0
    %v665 = vand.u32 %v49, 4294901760
    %666 = vmatpush1.msra.mxu0 %v665
    %667 = vmatprep.subr.mxu0 0.0
    %v668 = vand.u32 %v50, 4294901760
    %669 = vmatpush1.msra.mxu0 %v668
    %670 = vmatprep.subr.mxu0 0.0
    %v671 = vand.u32 %v51, 4294901760
    %672 = vmatpush1.msra.mxu0 %v671
    %673 = vmatprep.subr.mxu0 0.0
    %v674 = vand.u32 %v52, 4294901760
    %675 = vmatpush1.msra.mxu0 %v674
    %676 = vmatprep.subr.mxu0 0.0
    %v677 = vand.u32 %v53, 4294901760
    %678 = vmatpush1.msra.mxu0 %v677
    %679 = vmatprep.subr.mxu0 0.0
    %v680 = vand.u32 %v54, 4294901760
    %681 = vmatpush1.msra.mxu0 %v680
    %682 = vmatprep.subr.mxu0 0.0
    %v683 = vand.u32 %v55, 4294901760
    %684 = vmatpush1.msra.mxu0 %v683
    %685 = vmatprep.subr.mxu0 0.0
    %v686 = vand.u32 %v56, 4294901760
    %687 = vmatpush1.msra.mxu0 %v686
    %688 = vmatprep.subr.mxu0 0.0
    %v689 = vand.u32 %v57, 4294901760
    %690 = vmatpush1.msra.mxu0 %v689
    %691 = vmatprep.subr.mxu0 0.0
    %v692 = vand.u32 %v58, 4294901760
    %693 = vmatpush1.msra.mxu0 %v692
    %694 = vmatprep.subr.mxu0 0.0
    %v695 = vand.u32 %v59, 4294901760
    %696 = vmatpush1.msra.mxu0 %v695
    %697 = vmatprep.subr.mxu0 0.0
    %v698 = vand.u32 %v60, 4294901760
    %699 = vmatpush1.msra.mxu0 %v698
    %700 = vmatprep.subr.mxu0 0.0
    %701 = vmatpush1.msra.mxu0 0.0
    %702 = vmatprep.subr.mxu0 0.0
    %703 = vmatpush1.msra.mxu0 0.0
    %704 = vmatprep.subr.mxu0 0.0
    %705 = vmatpush1.msra.mxu0 0.0
    %706 = vmatprep.subr.mxu0 0.0
    %707 = vmatpush1.msra.mxu0 0.0
    %708 = vmatprep.subr.mxu0 0.0
    %709 = vmatpush1.msra.mxu0 0.0
    %710 = vmatprep.subr.mxu0 0.0
    %711 = vmatpush1.msra.mxu0 0.0
    %712 = vmatprep.subr.mxu0 0.0
    %713 = vmatpush1.msra.mxu0 0.0
    %714 = vmatprep.subr.mxu0 0.0
    %715 = vmatpush1.msra.mxu0 0.0
    %716 = vmatprep.subr.mxu0 0.0
    %717 = vmatpush1.msra.mxu0 0.0
    %718 = vmatprep.subr.mxu0 0.0
    %719 = vmatpush1.msra.mxu0 0.0
    %720 = vmatprep.subr.mxu0 0.0
    %721 = vmatpush1.msra.mxu0 0.0
    %722 = vmatprep.subr.mxu0 0.0
    %723 = vmatpush1.msra.mxu0 0.0
    %724 = vmatprep.subr.mxu0 0.0
    %725 = vmatpush1.msra.mxu0 0.0
    %726 = vmatprep.subr.mxu0 0.0
    %727 = vmatpush1.msra.mxu0 0.0
    %728 = vmatprep.subr.mxu0 0.0
    %729 = vmatpush1.msra.mxu0 0.0
    %730 = vmatprep.subr.mxu0 0.0
    %731 = vmatpush1.msra.mxu0 0.0
    %732 = vmatprep.mubr.f32.mxu0 0.0
    %v733 = vand.u32 %v43, 4294901760
    %734 = vmatmul.mubr.f32.gmra.mrb[0].mxu0 %v733
    %v735 = vpop.f32.mrb[0].mxu0
    %v736 = vadd.f32 %v643, %v735
    %v737 = vpop.f32.mrb[0].mxu0
    %738 = vmatprep.mubr.f32.mxu0 0.0
    %v739 = vand.u32 %v44, 4294901760
    %740 = vmatmul.mubr.f32.gmra.mrb[0].mxu0 %v739
    %v741 = vpop.f32.mrb[0].mxu0
    %v742 = vadd.f32 %v649, %v741
    %v743 = vpop.f32.mrb[0].mxu0
    %744 = vdwg.mxu0
    %745 = vst [vmem:[#allocation6] sm:$0xff] %v736
    %746 = vst [vmem:[#allocation6 + $0x8] sm:$0xff] %v742
    %v747 = vld [vmem:[%s0] sm:$0xff]
    %v748 = vld [vmem:[%s0 + $0x8] sm:$0xff]
    %749 = vmax.xlane.f32.xlu0 %v736
    %v750 = vpop.xlane.xlu0 %749
    %751 = vmax.xlane.f32.xlu0 %v742
    %v752 = vpop.xlane.xlu0 %751
    %v753 = vsub.f32 %v736, %v750
    %v754 = vsub.f32 %v742, %v752
    %v755 = vmul.f32 %v753, 1.442695
    %v756 = vpow.pop %v755
    %v757 = vmul.f32 %v754, 1.442695
    %v758 = vpow.pop %v757
    %759 = vadd.xlane.f32.xlu0 %v756
    %v760 = vpop.xlane.xlu0 %759
    %761 = vadd.xlane.f32.xlu0 %v758
    %v762 = vpop.xlane.xlu0 %761
    %v763 = vlog2.pop %v760
    %v764 = vmul.f32 %v763, 0.6931472
    %v765 = vlog2.pop %v762
    %v766 = vmul.f32 %v765, 0.6931472
    %v767 = vadd.f32 %v764, %v750
    %v768 = vadd.f32 %v766, %v752
    %769 = vset.pattern.permute.xlu0 1
    %770 = vperm.xlu0 %769, %v747
    %v771 = vpop.permute.xlu0 %770
    %772 = vset.pattern.permute.xlu0 1
    %773 = vperm.xlu0 %772, %v748
    %v774 = vpop.permute.xlu0 %773
    %vm775 = vcmp.eq.s32.totalorder %v32, %v771
    %vm776 = vcmp.eq.s32.totalorder %v32, %v774
    %v777 = vsel %vm775, %v736, 0.0
    %v778 = vsel %vm776, %v742, 0.0
    %779 = vadd.xlane.f32.xlu0 %v777
    %v780 = vpop.xlane.xlu0 %779
    %781 = vadd.xlane.f32.xlu0 %v778
    %v782 = vpop.xlane.xlu0 %781
    %v783 = vsub.f32 %v767, %v780
    %v784 = vsub.f32 %v768, %v782
    %s785 = smul.u32 0, 16
    %v786 = vlaneseq
    %v787 = vshrl.u32 %v786, 7
    %v788 = vadd.s32 %v787, 8
    %v789 = vstv %s785
    %v790 = vadd.s32 %v789, %v787
    %v791 = vadd.s32 %v789, %v788
    %vm792 = vcmp.lt.s32.totalorder %v790, 16
    %vm793 = vcmp.lt.s32.totalorder %v791, 16
    %v794 = vsel %vm792, %v783, 0.0
    %v795 = vsel %vm793, %v784, 0.0
    %vm796 = vcmask 7168
    %v797 = vsel %vm796, %v794, 0.0
    %v798 = vsel %vm796, %v795, 0.0
    %v799 = vadd.f32 %v797, %v798
    %800 = vadd.xlane.f32.xlu0 %v799
    %v801 = vpop.xlane.xlu0 %800
    %v802 = vrot.slane %v801, 4
    %v803 = vadd.f32 %v801, %v802
    %v804 = vrot.slane %v803, 2
    %v805 = vadd.f32 %v803, %v804
    %v806 = vrot.slane %v805, 1
    %v807 = vadd.f32 %v805, %v806
    %s808 = vtos %v807
    %s809 = scalar_lea.smem [#allocation7], 0
    %810 = sst [smem:[%s809]] %s808
    // Predicated region
    $region14: #{tpu_custom_call.1} parent=1 // pred_check
      _
    $region15: #{tpu_custom_call.1} parent=1 // pred_check_branch
      %812 = sbr.rel (0) target = $region17
    $region16: #{tpu_custom_call.1} parent=1 // pred_region
      %s814 = ssub.s32 256, 256
      %815 = vsyncadd [#allocation4], %s814
      %s816 = sshll.u32 [#allocation6], 4
      %s817 = int_to_ptr.vmem [resolvable:$true] %s816
      %822 = dma.vmem_to_hbm [thread:$0]  %s817, 256, %s2, [#allocation4], 128, 128, 8
    $region17: #{tpu_custom_call.1} parent=1 // pred_fallthru
      _
    // Predicated region
    $region18: #{tpu_custom_call.1} parent=1 // pred_check
      _
    $region19: #{tpu_custom_call.1} parent=1 // pred_check_branch
      %824 = sbr.rel (0) target = $region21
    $region20: #{tpu_custom_call.1} parent=1 // pred_region
      %s826 = ssub.s32 16, 16
      %827 = vsyncadd [#allocation5], %s826
      %830 = dma.smem_to_hbm [#allocation7], 16, %s3, [#allocation5]
    $region21: #{tpu_custom_call.1} parent=1 // pred_fallthru
      _
    // Predicated region
    $region22: #{tpu_custom_call.1} parent=1 // pred_check
      _
    $region23: #{tpu_custom_call.1} parent=1 // pred_check_branch
      %832 = sbr.rel (0) target = $region25
    $region24: #{tpu_custom_call.1} parent=1 // pred_region
      %833 = dma.done [#allocation4], 256
    $region25: #{tpu_custom_call.1} parent=1 // pred_fallthru
      _
    // Predicated region
    $region26: #{tpu_custom_call.1} parent=1 // pred_check
      _
    $region27: #{tpu_custom_call.1} parent=1 // pred_check_branch
      %835 = sbr.rel (0) target = $region29
    $region28: #{tpu_custom_call.1} parent=1 // pred_region
      %836 = dma.done [#allocation5], 16
    $region29: #{tpu_custom_call.1} parent=1 // pred_fallthru
      _
    %837 = sfence
    %838 = vsyncpa [#allocation3], 1
    %839 = vsyncpa [#allocation4], 1
    %840 = vsyncpa [#allocation5], 1

</llo_original>
